<compile_context>
chip_gen: v6e
topology: v6e:2x2x1
jax: 0.10.0
libtpu: 0.0.40
codegen_flags: <defaults>
</compile_context>

<pallas_src>
import functools

import jax
import jax.numpy as jnp
from jax.experimental import pallas as pl
from jax.experimental.pallas import tpu as pltpu


_LANE = 128
_SUBLANE = 8


# ----------------------------- Pallas kernels ------------------------------ #

def _mean_nodes_kernel(feats_ref, out_ref):
    # feats_ref: (TB, N, F) block in VMEM; out_ref: (TB, F)
    x = feats_ref[...].astype(jnp.float32)        # no-op for f32 inputs
    n = x.shape[1]
    s = jnp.sum(x, axis=1)                        # VPU/XLU sublane reduce, f32
    out_ref[...] = (s * (1.0 / n)).astype(out_ref.dtype)


def _weighted_mean_nodes_kernel(feats_ref, w_ref, out_ref):
    # dgl.readout_nodes(op='mean', weight=w): mean over nodes of (feat * w).
    x = feats_ref[...].astype(jnp.float32)        # (TB, N, F)
    w = w_ref[...].astype(jnp.float32)            # (TB, N, 1): lane-broadcast
    n = x.shape[1]
    s = jnp.sum(x * w, axis=1)                    # (TB, F), f32 accumulate
    out_ref[...] = (s * (1.0 / n)).astype(out_ref.dtype)


# ------------------------------ tiling helpers ------------------------------ #

def _cdiv(a, b):
    return -(-a // b)


def _round_up(x, m):
    return _cdiv(x, m) * m


def _sanitize_tb(tb, B):
    """Clamp the batch tile and keep it sublane-friendly when it is partial.

    The output BlockSpec is (tb, F); its second-to-last dim must be a multiple
    of 8 unless it equals the full batch dim.
    """
    tb = int(max(1, min(int(tb), B)))
    if tb < B:
        tb = max(_SUBLANE, (tb // _SUBLANE) * _SUBLANE)
        if tb >= B:
            tb = B
    return tb


def _padded_graph_bytes(N, F, itemsize, with_weights):
    """Padded VMEM footprint of one graph's inputs (feats + optional weights).

    F rides the 128-wide lane axis and N the 8-deep sublane axis, so the real
    VMEM cost per graph is ceil(N/8)*8 * ceil(F/128)*128 regardless of nominal
    F. The (N, 1) weight slice pads its lane dim to 128 as well.
    """
    fb = _round_up(N, _SUBLANE) * _round_up(F, _LANE) * itemsize
    wb = _round_up(N, _SUBLANE) * _LANE * itemsize if with_weights else 0
    return fb + wb


def _real_graph_bytes(N, F, itemsize, with_weights):
    return N * F * itemsize + (N * itemsize if with_weights else 0)


def _choose_tb(B, N, F, itemsize, with_weights,
               target_tile_bytes=8 << 20,        # ~8 MiB padded input per step
               min_real_bytes_per_step=512 << 10,  # roofline-friendly floor
               min_grid_steps=4):                # >=2 steps per v7x TensorCore
    padded_pg = _padded_graph_bytes(N, F, itemsize, with_weights)
    real_pg = _real_graph_bytes(N, F, itemsize, with_weights)

    tb = _sanitize_tb(max(1, target_tile_bytes // padded_pg), B)

    # Prefer >= min_grid_steps grid steps (megacore pipelining on v7x), but
    # only when the smaller tile still moves >= min_real_bytes_per_step of
    # real HBM data per step; otherwise keep the big tile (v5e/v6e single-TC).
    if _cdiv(B, tb) < min_grid_steps:
        cand = _sanitize_tb(max(1, _cdiv(B, min_grid_steps)), B)
        if cand < tb and cand * real_pg >= min_real_bytes_per_step:
            tb = cand
    return tb


def _vmem_limit_bytes(tb, N, F, itemsize, with_weights):
    """Scoped-VMEM request: double-buffered in/out tiles + compiler headroom."""
    fb = tb * _round_up(N, _SUBLANE) * _round_up(F, _LANE) * itemsize
    wb = tb * _round_up(N, _SUBLANE) * _LANE * itemsize if with_weights else 0
    ob = _round_up(tb, _SUBLANE) * _round_up(F, _LANE) * itemsize
    need = 2 * (fb + wb + ob) + (2 << 20)
    # At least the v5e default, and kept under v7x's 32 MiB scoped ceiling.
    return int(min(max(need, 16 << 20), 30 << 20))


# ------------------------------ JAX wrappers -------------------------------- #

@functools.partial(jax.jit, static_argnames=("block_graphs",))
def mean_nodes_readout(node_feats, *, block_graphs=None):
    """AR readout (dgl.mean_nodes) over the node axis. [B, N, F] -> [B, F]."""
    B, N, F = node_feats.shape
    itemsize = jnp.dtype(node_feats.dtype).itemsize
    if block_graphs is None:
        tb = _choose_tb(B, N, F, itemsize, with_weights=False)
    else:
        tb = _sanitize_tb(block_graphs, B)

    return pl.pallas_call(
        _mean_nodes_kernel,
        out_shape=jax.ShapeDtypeStruct((B, F), node_feats.dtype),
        grid_spec=pltpu.PrefetchScalarGridSpec(
            num_scalar_prefetch=0,
            grid=(_cdiv(B, tb),),            # partial last block; no jnp.pad
            in_specs=[pl.BlockSpec((tb, N, F), lambda b: (b, 0, 0))],
            out_specs=pl.BlockSpec((tb, F), lambda b: (b, 0)),
        ),
        compiler_params=pltpu.CompilerParams(
            dimension_semantics=("parallel",),
            vmem_limit_bytes=_vmem_limit_bytes(tb, N, F, itemsize, False),
        ),
    )(node_feats)


@functools.partial(jax.jit, static_argnames=("block_graphs",))
def weighted_mean_nodes_readout(node_feats, node_weights, *, block_graphs=None):
    """AR readout with 'sp_weights' (Identity weigher): mean over nodes of feat*w."""
    B, N, F = node_feats.shape
    itemsize = jnp.dtype(node_feats.dtype).itemsize
    if block_graphs is None:
        tb = _choose_tb(B, N, F, itemsize, with_weights=True)
    else:
        tb = _sanitize_tb(block_graphs, B)

    # (B, N, 1): the node axis shares the sublane layout of the feats tile, so
    # the in-kernel multiply is a cheap lane-broadcast (no relayout). Free
    # reshape either from (B, N, 1) or (B, N).
    w = node_weights.reshape(B, N, 1)

    return pl.pallas_call(
        _weighted_mean_nodes_kernel,
        out_shape=jax.ShapeDtypeStruct((B, F), node_feats.dtype),
        grid_spec=pltpu.PrefetchScalarGridSpec(
            num_scalar_prefetch=0,
            grid=(_cdiv(B, tb),),            # partial last block; no jnp.pad
            in_specs=[pl.BlockSpec((tb, N, F), lambda b: (b, 0, 0)),
                      pl.BlockSpec((tb, N, 1), lambda b: (b, 0, 0))],
            out_specs=pl.BlockSpec((tb, F), lambda b: (b, 0)),
        ),
        compiler_params=pltpu.CompilerParams(
            dimension_semantics=("parallel",),
            vmem_limit_bytes=_vmem_limit_bytes(tb, N, F, itemsize, True),
        ),
    )(node_feats, w)


class SPReader:
    """JAX/Pallas port of SPReader (readout_function='AR')."""

    def __init__(self, feat_in_dim, readout_function='AR', weigher_mode=None,
                 weights_in_dim=0):
        assert readout_function == 'AR', "only 'AR' readout is implemented"
        assert weigher_mode in (None, 'sp_weights'), \
            "only weigher_mode in (None, 'sp_weights') is implemented"
        self.weigher_mode = weigher_mode
        self.embed_dim = feat_in_dim   # AR: embed_dim == feat_in_dim

    def __call__(self, node_feats, aggregated_weights=None):
        if self.weigher_mode is None:
            return mean_nodes_readout(node_feats)
        # 'sp_weights': weigher is nn.Identity() on aggregated_weights.
        return weighted_mean_nodes_readout(node_feats, aggregated_weights)


# --------------------------------- main ------------------------------------ #

if __name__ == "__main__":
    key = jax.random.PRNGKey(0)
    B, N, F = 2, 16, 32     # batch of spider patches, nodes per patch, feat_in_dim
    k1, k2, k3, k4, k5, k6 = jax.random.split(key, 6)
    node_feats = jax.random.normal(k1, (B, N, F), dtype=jnp.float32)
    agg_weights = jax.random.uniform(k2, (B, N, 1), dtype=jnp.float32)

    # Default SPReader: readout='AR', weigher_mode=None  ->  mean over nodes.
    reader = SPReader(feat_in_dim=F, readout_function='AR', weigher_mode=None)
    out = jax.block_until_ready(reader(node_feats))
    ref = jnp.mean(node_feats, axis=1)
    assert out.shape == (B, F)
    assert jnp.allclose(out, ref, atol=1e-5, rtol=1e-5), "AR readout mismatch"

    # 'sp_weights' mode: Identity weigher on aggregated_weights.
    reader_w = SPReader(feat_in_dim=F, readout_function='AR',
                        weigher_mode='sp_weights')
    out_w = jax.block_until_ready(reader_w(node_feats, agg_weights))
    ref_w = jnp.mean(node_feats * agg_weights, axis=1)
    assert jnp.allclose(out_w, ref_w, atol=1e-5, rtol=1e-5), \
        "weighted AR readout mismatch"

    # Odd batch, single full block.
    B2 = 7
    nf2 = jax.random.normal(k3, (B2, N, F), dtype=jnp.float32)
    w2 = jax.random.uniform(k4, (B2, N, 1), dtype=jnp.float32)
    out2 = jax.block_until_ready(reader(nf2))
    assert out2.shape == (B2, F)
    assert jnp.allclose(out2, jnp.mean(nf2, axis=1), atol=1e-5, rtol=1e-5), \
        "AR readout mismatch (B=7)"
    out2w = jax.block_until_ready(reader_w(nf2, w2))
    assert jnp.allclose(out2w, jnp.mean(nf2 * w2, axis=1), atol=1e-5, rtol=1e-5), \
        "weighted AR readout mismatch (B=7)"

    # Exercise a multi-step grid with a partial last block (replaces jnp.pad):
    # 20 graphs, 8 graphs per block -> 3 grid steps, last block half-valid.
    B3 = 20
    nf3 = jax.random.normal(k5, (B3, N, F), dtype=jnp.float32)
    w3 = jax.random.uniform(k6, (B3, N, 1), dtype=jnp.float32)
    out3 = jax.block_until_ready(mean_nodes_readout(nf3, block_graphs=8))
    assert out3.shape == (B3, F)
    assert jnp.allclose(out3, jnp.mean(nf3, axis=1), atol=1e-5, rtol=1e-5), \
        "tiled AR readout mismatch"
    out3w = jax.block_until_ready(
        weighted_mean_nodes_readout(nf3, w3, block_graphs=8))
    assert jnp.allclose(out3w, jnp.mean(nf3 * w3, axis=1), atol=1e-5, rtol=1e-5), \
        "tiled weighted AR readout mismatch"

    print("KERNEL_OK")
</pallas_src>

<mosaic_0001>
module attributes {stable_mosaic.version = 11 : i64} {
  func.func @_mean_nodes_kernel(%arg0: i32, %arg1: memref<2x16x32xf32, #tpu.memory_space<vmem>>, %arg2: memref<2x32xf32, #tpu.memory_space<vmem>>) attributes {dimension_semantics = [#tpu.dimension_semantics<parallel>], iteration_bounds = array<i64: 1>, scalar_prefetch = 0 : i64, scratch_operands = 0 : i64, tpu.core_type = #tpu.core_type<tc>, window_params = [{transform_indices = @transform_0, window_bounds = array<i64: 2, 16, 32>}, {transform_indices = @transform_1, window_bounds = array<i64: 2, 32>}]} {
    %c0 = arith.constant 0 : index
    %c0_0 = arith.constant 0 : index
    %c0_1 = arith.constant 0 : index
    %0 = vector.load %arg1[%c0, %c0_0, %c0_1] : memref<2x16x32xf32, #tpu.memory_space<vmem>>, vector<2x16x32xf32>
    %cst = arith.constant dense<0.000000e+00> : vector<2x32xf32>
    %1 = vector.multi_reduction <add>, %0, %cst [1] : vector<2x16x32xf32> to vector<2x32xf32>
    %cst_2 = arith.constant 6.250000e-02 : f32
    %2 = vector.broadcast %cst_2 : f32 to vector<2x32xf32>
    %3 = arith.mulf %1, %2 : vector<2x32xf32>
    %c0_3 = arith.constant 0 : index
    %c0_4 = arith.constant 0 : index
    %4 = vector.load %arg2[%c0_3, %c0_4] : memref<2x32xf32, #tpu.memory_space<vmem>>, vector<2x32xf32>
    tpu.vector_store %arg2[%c0_3, %c0_4], %3 {strides = array<i32>} : memref<2x32xf32, #tpu.memory_space<vmem>>, vector<2x32xf32>,
    return
  }
  func.func @transform_0(%arg0: i32) -> (i32, i32, i32) {
    %c0_i32 = arith.constant 0 : i32
    %c0_i32_0 = arith.constant 0 : i32
    %c0_i32_1 = arith.constant 0 : i32
    return %arg0, %c0_i32, %c0_i32_0 : i32, i32, i32
  }
  func.func @transform_1(%arg0: i32) -> (i32, i32) {
    %c0_i32 = arith.constant 0 : i32
    %c0_i32_0 = arith.constant 0 : i32
    return %arg0, %c0_i32 : i32, i32
  }
}

</mosaic_0001>

<llo_original>
// kernel: mean_nodes_readout.1
$region0: #{mean_nodes_readout.1}
  #allocation0 [shape = 'u32[]', space=smem, size = 0x4, offset = 0x4, fixed_abs, tag = 'smem constant byte address 0x4 - core index']
  #allocation1 [shape = 'u32[144,128]{1,0:T(1,128)}', space=vmem, size = 0x12000, scoped, tag = 'internal scratch']
  %s0 = inlined_call_operand.hbm [shape: f32[2,16,32], index: 0, kind: input, shape index: {}]
  %s1 = inlined_call_operand.hbm [shape: f32[2,32], index: 1, kind: output, shape index: {}]
  %s2 = sld [smem:[#allocation0]]
  $region18: #{mean_nodes_readout.1} parent=0
    _
  %s4 = ssub.s32 1, %s2
  %s5 = scalar_select 0, %s4, %s2
  $region1: #{mean_nodes_readout.1} parent=0
    #allocation2 [shape = 'u8[16384]{0}', space=vmem, size = 0x4000, scoped, tag = 'input window, operand 0, single buffered']
    #allocation3 [shape = 's32[1]{0}', space=sflag, size = 0x4, scoped, tag = 'scoped memory for mean_nodes_readout.1']
    #allocation4 [shape = 's32[1]{0}', space=sflag, size = 0x4, scoped, tag = 'scoped memory for mean_nodes_readout.1']
    #allocation5 [shape = 'u8[1024]{0}', space=vmem, size = 0x400, scoped, tag = 'output window, operand 0, single buffered']
    %6 = vsyncpa [#allocation3], 0
    %7 = vsyncpa [#allocation4], 0
    // Predicated region
    $region2: #{mean_nodes_readout.1} parent=1 // pred_check
      _
    $region3: #{mean_nodes_readout.1} parent=1 // pred_check_branch
      %9 = sbr.rel (0) target = $region5
    $region4: #{mean_nodes_readout.1} parent=1 // pred_region
      %s11 = ssub.s32 512, 512
      %12 = vsyncadd [#allocation3], %s11
      %s13 = sshll.u32 [#allocation2], 4
      %s14 = int_to_ptr.vmem [resolvable:$true] %s13
      %19 = dma.hbm_to_vmem [thread:$0]  %s0, 512, %s14, [#allocation3], 128, 128, 8
    $region5: #{mean_nodes_readout.1} parent=1 // pred_fallthru
      _
    // Predicated region
    $region6: #{mean_nodes_readout.1} parent=1 // pred_check
      _
    $region7: #{mean_nodes_readout.1} parent=1 // pred_check_branch
      %21 = sbr.rel (0) target = $region9
    $region8: #{mean_nodes_readout.1} parent=1 // pred_region
      %22 = dma.done [#allocation3], 512
    $region9: #{mean_nodes_readout.1} parent=1 // pred_fallthru
      _
    %v23 = vld [vmem:[#allocation2] sm:$0xff]
    %v24 = vld [vmem:[#allocation2 + $0x8] sm:$0xff]
    %v25 = vld [vmem:[#allocation2 + $0x10] sm:$0xff]
    %v26 = vld [vmem:[#allocation2 + $0x18] sm:$0xff]
    %vm27 = vcmask 261120
    %v28 = vsel %vm27, %v23, 0.0
    %v29 = vsel %vm27, %v24, 0.0
    %v30 = vadd.f32 %v28, %v29
    %v31 = vrot.slane %v30, 4
    %v32 = vadd.f32 %v30, %v31
    %v33 = vrot.slane %v32, 2
    %v34 = vadd.f32 %v32, %v33
    %v35 = vrot.slane %v34, 1
    %v36 = vadd.f32 %v34, %v35
    %v37 = vsel %vm27, %v25, 0.0
    %v38 = vsel %vm27, %v26, 0.0
    %v39 = vadd.f32 %v37, %v38
    %v40 = vrot.slane %v39, 4
    %v41 = vadd.f32 %v39, %v40
    %v42 = vrot.slane %v41, 2
    %v43 = vadd.f32 %v41, %v42
    %v44 = vrot.slane %v43, 1
    %v45 = vadd.f32 %v43, %v44
    %v46 = vmul.f32 %v36, 0.0625
    %v47 = vmul.f32 %v45, 0.0625
    %vm50 = vcmask 1041409
    %v51 = vsel %vm50, %v47, %v46
    %vm53 = vcmask 254976
    %54 = vst.msk [vmem:[#allocation5] sm:$0x3] %vm53, %v51
    // Predicated region
    $region10: #{mean_nodes_readout.1} parent=1 // pred_check
      _
    $region11: #{mean_nodes_readout.1} parent=1 // pred_check_branch
      %56 = sbr.rel (0) target = $region13
    $region12: #{mean_nodes_readout.1} parent=1 // pred_region
      %s58 = ssub.s32 32, 32
      %59 = vsyncadd [#allocation4], %s58
      %s61 = sshll.u32 [#allocation5], 4
      %s62 = int_to_ptr.vmem [resolvable:$true] %s61
      %64 = dma.vmem_to_hbm [thread:$0]  %s62, 32, %s1, [#allocation4]
    $region13: #{mean_nodes_readout.1} parent=1 // pred_fallthru
      _
    // Predicated region
    $region14: #{mean_nodes_readout.1} parent=1 // pred_check
      _
    $region15: #{mean_nodes_readout.1} parent=1 // pred_check_branch
      %66 = sbr.rel (0) target = $region17
    $region16: #{mean_nodes_readout.1} parent=1 // pred_region
      %67 = dma.done [#allocation4], 32
    $region17: #{mean_nodes_readout.1} parent=1 // pred_fallthru
      _
    %68 = vsyncpa [#allocation3], 1
    %69 = vsyncpa [#allocation4], 1

</llo_original>
